<compile_context>
chip_gen: v7x
topology: tpu7x:2x2x1
jax: 0.10.0
libtpu: 0.0.40
codegen_flags: <defaults>
</compile_context>

<pallas_src>
import functools

import jax
import jax.numpy as jnp
from jax import lax
from jax.experimental import pallas as pl
from jax.experimental.pallas import tpu as pltpu

N_SUBSTEPS = 4                     # Euler sub-steps per timepoint interval
COMPUTE_DTYPE = jnp.bfloat16       # MXU input dtype (f32 accumulation kept)


# ----------------------------------------------------------------------------
# Padding / tiling helpers (all run OUTSIDE the kernels, once per call).
# ----------------------------------------------------------------------------
def _ru(x, m):
    return (x + m - 1) // m * m


def _pad2(a, rows, cols, dtype=None):
    a = jnp.pad(a, ((0, rows - a.shape[0]), (0, cols - a.shape[1])))
    return a.astype(dtype) if dtype is not None else a


def _cell_tiling(n_cells, max_tile):
    """Cell tile (multiple of 16 for bf16 sublane packing) and padded count.

    If the whole problem fits one tile, split into two so a 'parallel' grid
    axis still feeds both TensorCores on v7x.
    """
    padded = _ru(n_cells, 16)
    ct = min(_ru(max_tile, 16), padded)
    np_ = _ru(n_cells, ct)
    if np_ == ct and ct > 16:
        ct = _ru(pl.cdiv(ct, 2), 16)
        np_ = _ru(n_cells, ct)
    return ct, np_


def _feat_tiling(dim, max_tile):
    """Lane-dense (multiple-of-128) feature tile and padded feature count."""
    t = min(_ru(max_tile, 128), _ru(dim, 128))
    return t, _ru(dim, t)


def _hw_config():
    """(vmem_limit_bytes, max_cell_tile, max_out_tile, max_gene_tile) per chip."""
    try:
        cap = pltpu.get_tpu_info().vmem_capacity_bytes
    except Exception:  # pragma: no cover - fall back to the smallest (v7x) budget
        cap = 64 * 1024 * 1024
    vmem_limit = min(int(cap * 3 // 4), 100 * 1024 * 1024)
    if cap >= 96 * 1024 * 1024:        # v5e / v6e: 128 MiB physical VMEM
        return vmem_limit, 512, 1024, 2048
    return vmem_limit, 256, 512, 2048  # v7x: 64 MiB physical VMEM


# ----------------------------------------------------------------------------
# Kernel 1: anchor encoder (LinearNet) + fusion layer (LinearVAENet), fused.
# Grid = (cell_tiles ["parallel"], gene K-tiles ["arbitrary"]).
# Layer-1 accumulates x @ w1 over gene tiles into an f32 VMEM scratch; the
# ReLU + second layer + concatenated mu/logvar head + reparam sample run once
# under pl.when(last K tile).
# ----------------------------------------------------------------------------
def _enc_fusion_kernel(x_ref, w1, b1, w2, b2, wmv, bmv, eps_ref, z0_ref,
                       acc_ref):
    k = pl.program_id(1)

    @pl.when(k == 0)
    def _():
        acc_ref[...] = jnp.zeros_like(acc_ref)

    acc_ref[...] += jnp.dot(x_ref[...], w1[...],
                            preferred_element_type=jnp.float32)

    @pl.when(k == pl.num_programs(1) - 1)
    def _():
        lp = z0_ref.shape[1]
        h = jnp.maximum(acc_ref[...] + b1[...], 0.0)
        e = jnp.dot(h.astype(COMPUTE_DTYPE), w2[...],
                    preferred_element_type=jnp.float32) + b2[...]
        # Concatenated mu/logvar head: one 2*lp-wide matmul, split statically.
        mv = jnp.dot(e.astype(COMPUTE_DTYPE), wmv[...],
                     preferred_element_type=jnp.float32) + bmv[...]
        mu = mv[:, :lp]
        logvar = mv[:, lp:]
        std = jnp.exp(0.5 * logvar)
        # Reparameterization trick; eps is generated deterministically outside.
        z0_ref[...] = mu + std * eps_ref[...]


def enc_fusion(x_p, eps_p, w1, b1, w2, b2, wmv, bmv, *, cell_tile, gene_tile,
               vmem_limit):
    np_, gp = x_p.shape
    h1p = w1.shape[1]
    lp = eps_p.shape[1]
    n_ct = np_ // cell_tile
    n_kt = gp // gene_tile
    const = lambda c, k: (0, 0)
    grid_spec = pltpu.PrefetchScalarGridSpec(
        num_scalar_prefetch=0,
        grid=(n_ct, n_kt),
        in_specs=[
            pl.BlockSpec((cell_tile, gene_tile), lambda c, k: (c, k)),  # x
            pl.BlockSpec((gene_tile, h1p), lambda c, k: (k, 0)),        # enc w1
            pl.BlockSpec((1, h1p), const),                              # enc b1
            pl.BlockSpec((h1p, lp), const),                             # enc w2
            pl.BlockSpec((1, lp), const),                               # enc b2
            pl.BlockSpec((lp, 2 * lp), const),                          # mu|logvar W
            pl.BlockSpec((1, 2 * lp), const),                           # mu|logvar b
            pl.BlockSpec((cell_tile, lp), lambda c, k: (c, 0)),         # eps
        ],
        out_specs=pl.BlockSpec((cell_tile, lp), lambda c, k: (c, 0)),
        scratch_shapes=[pltpu.VMEM((cell_tile, h1p), jnp.float32)],
    )
    return pl.pallas_call(
        _enc_fusion_kernel,
        out_shape=jax.ShapeDtypeStruct((np_, lp), jnp.float32),
        grid_spec=grid_spec,
        compiler_params=pltpu.CompilerParams(
            dimension_semantics=("parallel", "arbitrary"),
            vmem_limit_bytes=vmem_limit),
    )(x_p, w1, b1, w2, b2, wmv, bmv, eps_p)


# ----------------------------------------------------------------------------
# Kernel 2: fused neural-ODE integration (Euler) for BOTH modalities.
# Grid = (cell_tiles ["parallel"],) only; the whole concatenated time loop runs
# inside the body (pl.loop), writing one (n_tp, cell_tile, lp) output slab per
# cell tile.  State resets to z0 at t == 0 and t == t_rna (ATAC restart).
# A second bf16 copy of the latent slab is written for the decoders.
# ----------------------------------------------------------------------------
def _ode_kernel(dt_ref, z0_ref, w1, b1, w2, b2, of32_ref, obf_ref, z_sc, *,
                t_reset):
    # Hoist weight/bias loads out of the time loop.
    w1v = w1[...]
    b1v = b1[...]
    w2v = w2[...]
    b2v = b2[...]
    n_tp = of32_ref.shape[0]

    @pl.loop(0, n_tp)
    def _(t):
        reset = jnp.logical_or(t == 0, t == t_reset)

        @pl.when(reset)
        def _():
            z_sc[...] = z0_ref[...]

        @pl.when(jnp.logical_not(reset))
        def _():
            dt = dt_ref[t]

            def step(_, z):
                h = jnp.tanh(
                    jnp.dot(z.astype(COMPUTE_DTYPE), w1v,
                            preferred_element_type=jnp.float32) + b1v)
                dz = jnp.dot(h.astype(COMPUTE_DTYPE), w2v,
                             preferred_element_type=jnp.float32) + b2v
                return z + dt * dz

            z_sc[...] = lax.fori_loop(0, N_SUBSTEPS, step, z_sc[...],
                                      unroll=True)

        of32_ref[t] = z_sc[...]
        obf_ref[t] = z_sc[...].astype(COMPUTE_DTYPE)


def ode_integrate(z0_p, dt_all, t_reset, w1, b1, w2, b2, *, cell_tile,
                  vmem_limit):
    np_, lp = z0_p.shape
    hp = w1.shape[1]
    n_tp = dt_all.shape[0]
    n_ct = np_ // cell_tile
    const = lambda c: (0, 0)
    grid_spec = pltpu.PrefetchScalarGridSpec(
        num_scalar_prefetch=0,
        grid=(n_ct,),
        in_specs=[
            pl.BlockSpec(memory_space=pltpu.MemorySpace.SMEM),   # dt per timepoint
            pl.BlockSpec((cell_tile, lp), lambda c: (c, 0)),     # z0 tile
            pl.BlockSpec((lp, hp), const),                       # ode w1
            pl.BlockSpec((1, hp), const),                        # ode b1
            pl.BlockSpec((hp, lp), const),                       # ode w2
            pl.BlockSpec((1, lp), const),                        # ode b2
        ],
        out_specs=[
            pl.BlockSpec((n_tp, cell_tile, lp), lambda c: (0, c, 0)),  # f32 latent
            pl.BlockSpec((n_tp, cell_tile, lp), lambda c: (0, c, 0)),  # bf16 latent
        ],
        scratch_shapes=[pltpu.VMEM((cell_tile, lp), jnp.float32)],
    )
    return pl.pallas_call(
        functools.partial(_ode_kernel, t_reset=t_reset),
        out_shape=(jax.ShapeDtypeStruct((n_tp, np_, lp), jnp.float32),
                   jax.ShapeDtypeStruct((n_tp, np_, lp), COMPUTE_DTYPE)),
        grid_spec=grid_spec,
        compiler_params=pltpu.CompilerParams(
            dimension_semantics=("parallel",),
            vmem_limit_bytes=vmem_limit),
    )(dt_all, z0_p, w1, b1, w2, b2)


# ----------------------------------------------------------------------------
# Kernel 3: decoder MLP (rna_dec: plain; atac_dec: sigmoid).  Time is flattened
# into the cell axis outside; grid = (out_tiles OUTER, flat cell_tiles INNER),
# so the large hdp x n_peaks weight streams from HBM exactly once and the cheap
# narrow-latent first layer is recomputed per out tile.
# ----------------------------------------------------------------------------
def _dec_kernel(z_ref, w1, b1, w2, b2, out_ref, *, sigmoid):
    z = z_ref[...].astype(COMPUTE_DTYPE)
    h = jnp.maximum(
        jnp.dot(z, w1[...], preferred_element_type=jnp.float32) + b1[...], 0.0)
    o = jnp.dot(h.astype(COMPUTE_DTYPE), w2[...],
                preferred_element_type=jnp.float32) + b2[...]
    if sigmoid:
        # exp rides the EUP; approx reciprocal avoids the VALU divide.
        o = pl.reciprocal(1.0 + jnp.exp(-o), approx=True)
    out_ref[...] = o


def decode(latent_flat, w1, b1, w2, b2, *, cell_tile, out_tile, sigmoid,
           vmem_limit):
    f, lp = latent_flat.shape
    hp = w1.shape[1]
    op = w2.shape[1]
    n_fc = f // cell_tile
    n_ot = op // out_tile
    grid_spec = pltpu.PrefetchScalarGridSpec(
        num_scalar_prefetch=0,
        grid=(n_ot, n_fc),                                     # cells innermost
        in_specs=[
            pl.BlockSpec((cell_tile, lp), lambda n, c: (c, 0)),     # latent (bf16)
            pl.BlockSpec((lp, hp), lambda n, c: (0, 0)),            # dec w1
            pl.BlockSpec((1, hp), lambda n, c: (0, 0)),             # dec b1
            pl.BlockSpec((hp, out_tile), lambda n, c: (0, n)),      # dec w2 tile
            pl.BlockSpec((1, out_tile), lambda n, c: (0, n)),       # dec b2 tile
        ],
        out_specs=pl.BlockSpec((cell_tile, out_tile), lambda n, c: (c, n)),
    )
    return pl.pallas_call(
        functools.partial(_dec_kernel, sigmoid=sigmoid),
        out_shape=jax.ShapeDtypeStruct((f, op), jnp.float32),
        grid_spec=grid_spec,
        compiler_params=pltpu.CompilerParams(
            dimension_semantics=("parallel", "parallel"),
            vmem_limit_bytes=vmem_limit),
    )(latent_flat, w1, b1, w2, b2)


# ----------------------------------------------------------------------------
# scMultiNODE.forward (anchor_mod='rna', batch_size=None)
# ----------------------------------------------------------------------------
def scmultinode_forward(params, first_tp_data, rna_tp, atac_tp, eps,
                        *, max_cell_tile=None, max_out_tile=None,
                        max_gene_tile=None, vmem_limit_bytes=None):
    # TODO(synk): batch_size subsampling in the torch forward uses host-side
    # np.random.choice; not implemented inside the kernels (batch_size=None path).
    hw_vmem, hw_ct, hw_ot, hw_gt = _hw_config()
    vmem_limit = vmem_limit_bytes or hw_vmem
    max_cell_tile = max_cell_tile or hw_ct
    max_out_tile = max_out_tile or hw_ot
    max_gene_tile = max_gene_tile or hw_gt

    n_cells, n_genes = first_tp_data.shape
    latent_dim = params["fusion_wm"].shape[1]
    enc_hidden = params["enc_w1"].shape[1]
    ode_hidden = params["ode_w1"].shape[1]
    dec_hidden = params["rna_dec_w1"].shape[1]
    n_peaks = params["atac_dec_w2"].shape[1]
    t_rna, t_atac = rna_tp.shape[0], atac_tp.shape[0]

    ct, np_ = _cell_tiling(n_cells, max_cell_tile)
    gt, gp = _feat_tiling(n_genes, max_gene_tile)
    h1p = _ru(enc_hidden, 128)
    lp = _ru(latent_dim, 128)
    hop = _ru(ode_hidden, 128)
    hdp = _ru(dec_hidden, 128)
    g_ot, g_op = _feat_tiling(n_genes, max_out_tile)
    p_ot, p_op = _feat_tiling(n_peaks, max_out_tile)

    cd = COMPUTE_DTYPE
    f32 = jnp.float32

    # Pad once outside the kernels (lane-dense, bf16 MXU inputs, f32 biases).
    x_p = _pad2(first_tp_data, np_, gp, cd)
    eps_p = _pad2(eps, np_, lp, f32)

    # Concatenated mu/logvar head (bit-identical to two separate matmuls).
    wmv = jnp.concatenate([_pad2(params["fusion_wm"], lp, lp, cd),
                           _pad2(params["fusion_wv"], lp, lp, cd)], axis=1)
    bmv = jnp.concatenate([_pad2(params["fusion_bm"], 1, lp, f32),
                           _pad2(params["fusion_bv"], 1, lp, f32)], axis=1)

    z0_p = enc_fusion(
        x_p, eps_p,
        _pad2(params["enc_w1"], gp, h1p, cd), _pad2(params["enc_b1"], 1, h1p, f32),
        _pad2(params["enc_w2"], h1p, lp, cd), _pad2(params["enc_b2"], 1, lp, f32),
        wmv, bmv, cell_tile=ct, gene_tile=gt, vmem_limit=vmem_limit)

    # Fused RNA + ATAC ODE integration over concatenated timepoints; per-step
    # dt (already divided by N_SUBSTEPS) lives in SMEM; the latent state resets
    # to z0 at t==0 and t==t_rna (handled statically inside the kernel).
    dt_rna = jnp.concatenate(
        [jnp.zeros((1,), f32), rna_tp[1:] - rna_tp[:-1]]) / float(N_SUBSTEPS)
    dt_atac = jnp.concatenate(
        [jnp.zeros((1,), f32), atac_tp[1:] - atac_tp[:-1]]) / float(N_SUBSTEPS)
    dt_all = jnp.concatenate([dt_rna, dt_atac]).astype(f32)

    lat_f32, lat_bf = ode_integrate(
        z0_p, dt_all, t_rna,
        _pad2(params["ode_w1"], lp, hop, cd), _pad2(params["ode_b1"], 1, hop, f32),
        _pad2(params["ode_w2"], hop, lp, cd), _pad2(params["ode_b2"], 1, lp, f32),
        cell_tile=ct, vmem_limit=vmem_limit)

    # Flatten time into the cell axis for the decoders (weight streamed once).
    rna_lat_flat = lat_bf[:t_rna].reshape(t_rna * np_, lp)
    atac_lat_flat = lat_bf[t_rna:].reshape(t_atac * np_, lp)

    rna_rec_flat = decode(
        rna_lat_flat,
        _pad2(params["rna_dec_w1"], lp, hdp, cd),
        _pad2(params["rna_dec_b1"], 1, hdp, f32),
        _pad2(params["rna_dec_w2"], hdp, g_op, cd),
        _pad2(params["rna_dec_b2"], 1, g_op, f32),
        cell_tile=ct, out_tile=g_ot, sigmoid=False, vmem_limit=vmem_limit)
    atac_rec_flat = decode(
        atac_lat_flat,
        _pad2(params["atac_dec_w1"], lp, hdp, cd),
        _pad2(params["atac_dec_b1"], 1, hdp, f32),
        _pad2(params["atac_dec_w2"], hdp, p_op, cd),
        _pad2(params["atac_dec_b2"], 1, p_op, f32),
        cell_tile=ct, out_tile=p_ot, sigmoid=True, vmem_limit=vmem_limit)

    # Strip padding back to the logical sizes.
    rna_recon_obs = rna_rec_flat.reshape(t_rna, np_, g_op)[:, :n_cells, :n_genes]
    atac_recon_obs = atac_rec_flat.reshape(t_atac, np_, p_op)[:, :n_cells, :n_peaks]
    rna_latent_seq = lat_f32[:t_rna, :n_cells, :latent_dim]
    atac_latent_seq = lat_f32[t_rna:, :n_cells, :latent_dim]
    return (rna_recon_obs, atac_recon_obs, first_tp_data,
            rna_latent_seq, atac_latent_seq)


# ----------------------------------------------------------------------------
# Pure-JAX reference (mirrors the bf16-input / f32-accumulation matmul path).
# ----------------------------------------------------------------------------
def _mm(a, w):
    return jnp.dot(a.astype(COMPUTE_DTYPE), w.astype(COMPUTE_DTYPE),
                   preferred_element_type=jnp.float32)


def _ref_forward(params, x, rna_tp, atac_tp, eps):
    h = jnp.maximum(_mm(x, params["enc_w1"]) + params["enc_b1"], 0.0)
    e = _mm(h, params["enc_w2"]) + params["enc_b2"]
    mu = _mm(e, params["fusion_wm"]) + params["fusion_bm"]
    logvar = _mm(e, params["fusion_wv"]) + params["fusion_bv"]
    z0 = mu + jnp.exp(0.5 * logvar) * eps

    def integrate(z0, tp):
        outs = [z0]
        z = z0
        for t in range(1, tp.shape[0]):
            dt = (tp[t] - tp[t - 1]) / float(N_SUBSTEPS)
            for _ in range(N_SUBSTEPS):
                hh = jnp.tanh(_mm(z, params["ode_w1"]) + params["ode_b1"])
                z = z + dt * (_mm(hh, params["ode_w2"]) + params["ode_b2"])
            outs.append(z)
        return jnp.stack(outs, axis=0)

    rna_lat = integrate(z0, rna_tp)
    atac_lat = integrate(z0, atac_tp)
    rna_rec = _mm(jnp.maximum(_mm(rna_lat, params["rna_dec_w1"])
                              + params["rna_dec_b1"], 0.0),
                  params["rna_dec_w2"]) + params["rna_dec_b2"]
    atac_rec = jax.nn.sigmoid(
        _mm(jnp.maximum(_mm(atac_lat, params["atac_dec_w1"])
                        + params["atac_dec_b1"], 0.0),
            params["atac_dec_w2"]) + params["atac_dec_b2"])
    return rna_rec, atac_rec, x, rna_lat, atac_lat


def _init_params(key, n_genes, n_peaks, latent_dim, enc_hidden, ode_hidden,
                 dec_hidden):
    ks = jax.random.split(key, 16)
    f32 = jnp.float32
    nrm = lambda k, s: (0.1 * jax.random.normal(k, s)).astype(f32)
    return {
        # rna_enc (anchor encoder, LinearNet)
        "enc_w1": nrm(ks[0], (n_genes, enc_hidden)),
        "enc_b1": nrm(ks[1], (1, enc_hidden)),
        "enc_w2": nrm(ks[2], (enc_hidden, latent_dim)),
        "enc_b2": nrm(ks[3], (1, latent_dim)),
        # fusion_layer (LinearVAENet)
        "fusion_wm": nrm(ks[4], (latent_dim, latent_dim)),
        "fusion_bm": nrm(ks[5], (1, latent_dim)),
        "fusion_wv": nrm(ks[6], (latent_dim, latent_dim)),
        "fusion_bv": nrm(ks[7], (1, latent_dim)),
        # diffeq_decoder ODE drift net
        "ode_w1": nrm(ks[8], (latent_dim, ode_hidden)),
        "ode_b1": nrm(ks[9], (1, ode_hidden)),
        "ode_w2": nrm(ks[10], (ode_hidden, latent_dim)),
        "ode_b2": nrm(ks[11], (1, latent_dim)),
        # rna_dec (LinearNet)
        "rna_dec_w1": nrm(ks[12], (latent_dim, dec_hidden)),
        "rna_dec_b1": nrm(ks[13], (1, dec_hidden)),
        "rna_dec_w2": nrm(ks[14], (dec_hidden, n_genes)),
        "rna_dec_b2": jnp.zeros((1, n_genes), f32),
        # atac_dec (LinearSigmoidNet)
        "atac_dec_w1": nrm(ks[15], (latent_dim, dec_hidden)),
        "atac_dec_b1": jnp.zeros((1, dec_hidden), f32),
        "atac_dec_w2": nrm(jax.random.fold_in(key, 99), (dec_hidden, n_peaks)),
        "atac_dec_b2": jnp.zeros((1, n_peaks), f32),
    }


if __name__ == "__main__":
    # Small shapes, chosen so the cell grid (2 tiles), the encoder gene K-grid
    # (2 tiles) and the decoder output-feature grids (2 tiles each) are all
    # actually exercised.
    n_cells, n_genes, n_peaks = 24, 150, 200
    latent_dim, enc_hidden, ode_hidden, dec_hidden = 16, 32, 32, 32
    t_rna, t_atac = 6, 5

    key = jax.random.PRNGKey(0)
    k_data, k_eps, k_param = jax.random.split(key, 3)

    first_tp_data = jax.random.normal(k_data, (n_cells, n_genes), jnp.float32)
    eps = jax.random.normal(k_eps, (n_cells, latent_dim), jnp.float32)
    rna_tp = jnp.arange(t_rna, dtype=jnp.float32)
    atac_tp = jnp.arange(t_atac, dtype=jnp.float32) * 1.5
    params = _init_params(k_param, n_genes, n_peaks, latent_dim, enc_hidden,
                          ode_hidden, dec_hidden)

    outs = scmultinode_forward(params, first_tp_data, rna_tp, atac_tp, eps,
                               max_cell_tile=16, max_out_tile=128,
                               max_gene_tile=128)
    outs = jax.block_until_ready(outs)

    refs = _ref_forward(params, first_tp_data, rna_tp, atac_tp, eps)
    for got, want in zip(outs, refs):
        assert got.shape == want.shape and got.dtype == want.dtype
        assert jnp.allclose(got, want, rtol=2e-2, atol=2e-2), "mismatch vs ref"

    print("KERNEL_OK")
</pallas_src>

<mosaic_0001>
module attributes {stable_mosaic.version = 11 : i64} {
  func.func @_enc_fusion_kernel(%arg0: i32, %arg1: i32, %arg2: memref<16x128xbf16, #tpu.memory_space<vmem>>, %arg3: memref<128x128xbf16, #tpu.memory_space<vmem>>, %arg4: memref<1x128xf32, #tpu.memory_space<vmem>>, %arg5: memref<128x128xbf16, #tpu.memory_space<vmem>>, %arg6: memref<1x128xf32, #tpu.memory_space<vmem>>, %arg7: memref<128x256xbf16, #tpu.memory_space<vmem>>, %arg8: memref<1x256xf32, #tpu.memory_space<vmem>>, %arg9: memref<16x128xf32, #tpu.memory_space<vmem>>, %arg10: memref<16x128xf32, #tpu.memory_space<vmem>>, %arg11: memref<16x128xf32, #tpu.memory_space<vmem>>) attributes {dimension_semantics = [#tpu.dimension_semantics<parallel>, #tpu.dimension_semantics<arbitrary>], iteration_bounds = array<i64: 2, 2>, scalar_prefetch = 0 : i64, scratch_operands = 1 : i64, tpu.core_type = #tpu.core_type<tc>, window_params = [{transform_indices = @transform_0, window_bounds = array<i64: 16, 128>}, {transform_indices = @transform_1, window_bounds = array<i64: 128, 128>}, {pipeline_mode = #tpu.pipeline_mode<synchronous>, transform_indices = @transform_2, window_bounds = array<i64: 1, 128>}, {pipeline_mode = #tpu.pipeline_mode<synchronous>, transform_indices = @transform_3, window_bounds = array<i64: 128, 128>}, {pipeline_mode = #tpu.pipeline_mode<synchronous>, transform_indices = @transform_4, window_bounds = array<i64: 1, 128>}, {pipeline_mode = #tpu.pipeline_mode<synchronous>, transform_indices = @transform_5, window_bounds = array<i64: 128, 256>}, {pipeline_mode = #tpu.pipeline_mode<synchronous>, transform_indices = @transform_6, window_bounds = array<i64: 1, 256>}, {transform_indices = @transform_7, window_bounds = array<i64: 16, 128>}, {transform_indices = @transform_8, window_bounds = array<i64: 16, 128>}]} {
    %c0_i32 = arith.constant 0 : i32
    %0 = arith.cmpi eq, %arg1, %c0_i32 : i32
    %1 = arith.extui %0 : i1 to i32
    %c0_i32_0 = arith.constant 0 : i32
    %2 = arith.cmpi ne, %1, %c0_i32_0 : i32
    scf.if %2 {
      %cst_9 = arith.constant 0.000000e+00 : f32
      %12 = vector.broadcast %cst_9 : f32 to vector<16x128xf32>
      %c0_10 = arith.constant 0 : index
      %c0_11 = arith.constant 0 : index
      %13 = vector.load %arg11[%c0_10, %c0_11] : memref<16x128xf32, #tpu.memory_space<vmem>>, vector<16x128xf32>
      tpu.vector_store %arg11[%c0_10, %c0_11], %12 {strides = array<i32>} : memref<16x128xf32, #tpu.memory_space<vmem>>, vector<16x128xf32>,
    } else {
    }
    %c0 = arith.constant 0 : index
    %c0_1 = arith.constant 0 : index
    %3 = vector.load %arg11[%c0, %c0_1] : memref<16x128xf32, #tpu.memory_space<vmem>>, vector<16x128xf32>
    %c0_2 = arith.constant 0 : index
    %c0_3 = arith.constant 0 : index
    %4 = vector.load %arg2[%c0_2, %c0_3] : memref<16x128xbf16, #tpu.memory_space<vmem>>, vector<16x128xbf16>
    %c0_4 = arith.constant 0 : index
    %c0_5 = arith.constant 0 : index
    %5 = vector.load %arg3[%c0_4, %c0_5] : memref<128x128xbf16, #tpu.memory_space<vmem>>, vector<128x128xbf16>
    %cst = arith.constant dense<0.000000e+00> : vector<16x128xf32>
    %6 = tpu.matmul %4, %5, %cst {dimension_numbers = #tpu.dot_dimension_numbers<[1], [0], [0], [1], [0, 0, 1, 1], [], []>} : vector<16x128xbf16>, vector<128x128xbf16>, vector<16x128xf32> -> vector<16x128xf32>
    %7 = arith.addf %3, %6 : vector<16x128xf32>
    %c0_6 = arith.constant 0 : index
    %c0_7 = arith.constant 0 : index
    %8 = vector.load %arg11[%c0_6, %c0_7] : memref<16x128xf32, #tpu.memory_space<vmem>>, vector<16x128xf32>
    tpu.vector_store %arg11[%c0_6, %c0_7], %7 {strides = array<i32>} : memref<16x128xf32, #tpu.memory_space<vmem>>, vector<16x128xf32>,
    %c1_i32 = arith.constant 1 : i32
    %9 = arith.cmpi eq, %arg1, %c1_i32 : i32
    %10 = arith.extui %9 : i1 to i32
    %c0_i32_8 = arith.constant 0 : i32
    %11 = arith.cmpi ne, %10, %c0_i32_8 : i32
    scf.if %11 {
      %c0_9 = arith.constant 0 : index
      %c0_10 = arith.constant 0 : index
      %12 = vector.load %arg11[%c0_9, %c0_10] : memref<16x128xf32, #tpu.memory_space<vmem>>, vector<16x128xf32>
      %c0_11 = arith.constant 0 : index
      %c0_12 = arith.constant 0 : index
      %13 = vector.load %arg4[%c0_11, %c0_12] : memref<1x128xf32, #tpu.memory_space<vmem>>, vector<1x128xf32>
      %14 = vector.broadcast %13 : vector<1x128xf32> to vector<16x128xf32>
      %15 = arith.addf %12, %14 : vector<16x128xf32>
      %cst_13 = arith.constant 0.000000e+00 : f32
      %16 = vector.broadcast %cst_13 : f32 to vector<16x128xf32>
      %17 = arith.maximumf %15, %16 : vector<16x128xf32>
      %18 = arith.truncf %17 : vector<16x128xf32> to vector<16x128xbf16>
      %c0_14 = arith.constant 0 : index
      %c0_15 = arith.constant 0 : index
      %19 = vector.load %arg5[%c0_14, %c0_15] : memref<128x128xbf16, #tpu.memory_space<vmem>>, vector<128x128xbf16>
      %cst_16 = arith.constant dense<0.000000e+00> : vector<16x128xf32>
      %20 = tpu.matmul %18, %19, %cst_16 {dimension_numbers = #tpu.dot_dimension_numbers<[1], [0], [0], [1], [0, 0, 1, 1], [], []>} : vector<16x128xbf16>, vector<128x128xbf16>, vector<16x128xf32> -> vector<16x128xf32>
      %c0_17 = arith.constant 0 : index
      %c0_18 = arith.constant 0 : index
      %21 = vector.load %arg6[%c0_17, %c0_18] : memref<1x128xf32, #tpu.memory_space<vmem>>, vector<1x128xf32>
      %22 = vector.broadcast %21 : vector<1x128xf32> to vector<16x128xf32>
      %23 = arith.addf %20, %22 : vector<16x128xf32>
      %24 = arith.truncf %23 : vector<16x128xf32> to vector<16x128xbf16>
      %c0_19 = arith.constant 0 : index
      %c0_20 = arith.constant 0 : index
      %25 = vector.load %arg7[%c0_19, %c0_20] : memref<128x256xbf16, #tpu.memory_space<vmem>>, vector<128x256xbf16>
      %cst_21 = arith.constant dense<0.000000e+00> : vector<16x256xf32>
      %26 = tpu.matmul %24, %25, %cst_21 {dimension_numbers = #tpu.dot_dimension_numbers<[1], [0], [0], [1], [0, 0, 1, 1], [], []>} : vector<16x128xbf16>, vector<128x256xbf16>, vector<16x256xf32> -> vector<16x256xf32>
      %c0_22 = arith.constant 0 : index
      %c0_23 = arith.constant 0 : index
      %27 = vector.load %arg8[%c0_22, %c0_23] : memref<1x256xf32, #tpu.memory_space<vmem>>, vector<1x256xf32>
      %28 = vector.broadcast %27 : vector<1x256xf32> to vector<16x256xf32>
      %29 = arith.addf %26, %28 : vector<16x256xf32>
      %30 = vector.extract_strided_slice %29 {offsets = [0, 0], sizes = [16, 128], strides = [1, 1]} : vector<16x256xf32> to vector<16x128xf32>
      %31 = vector.extract_strided_slice %29 {offsets = [0, 128], sizes = [16, 128], strides = [1, 1]} : vector<16x256xf32> to vector<16x128xf32>
      %cst_24 = arith.constant 5.000000e-01 : f32
      %32 = vector.broadcast %cst_24 : f32 to vector<16x128xf32>
      %33 = arith.mulf %32, %31 : vector<16x128xf32>
      %34 = math.exp %33 : vector<16x128xf32>
      %c0_25 = arith.constant 0 : index
      %c0_26 = arith.constant 0 : index
      %35 = vector.load %arg9[%c0_25, %c0_26] : memref<16x128xf32, #tpu.memory_space<vmem>>, vector<16x128xf32>
      %36 = arith.mulf %34, %35 : vector<16x128xf32>
      %37 = arith.addf %30, %36 : vector<16x128xf32>
      %c0_27 = arith.constant 0 : index
      %c0_28 = arith.constant 0 : index
      %38 = vector.load %arg10[%c0_27, %c0_28] : memref<16x128xf32, #tpu.memory_space<vmem>>, vector<16x128xf32>
      tpu.vector_store %arg10[%c0_27, %c0_28], %37 {strides = array<i32>} : memref<16x128xf32, #tpu.memory_space<vmem>>, vector<16x128xf32>,
    } else {
    }
    return
  }
  func.func @transform_0(%arg0: i32, %arg1: i32) -> (i32, i32) {
    %c0_i32 = arith.constant 0 : i32
    return %arg0, %arg1 : i32, i32
  }
  func.func @transform_1(%arg0: i32, %arg1: i32) -> (i32, i32) {
    %c0_i32 = arith.constant 0 : i32
    %c0_i32_0 = arith.constant 0 : i32
    return %arg1, %c0_i32 : i32, i32
  }
  func.func @transform_2(%arg0: i32, %arg1: i32) -> (i32, i32) {
    %c0_i32 = arith.constant 0 : i32
    %c0_i32_0 = arith.constant 0 : i32
    %c0_i32_1 = arith.constant 0 : i32
    return %c0_i32, %c0_i32_0 : i32, i32
  }
  func.func @transform_3(%arg0: i32, %arg1: i32) -> (i32, i32) {
    %c0_i32 = arith.constant 0 : i32
    %c0_i32_0 = arith.constant 0 : i32
    %c0_i32_1 = arith.constant 0 : i32
    return %c0_i32, %c0_i32_0 : i32, i32
  }
  func.func @transform_4(%arg0: i32, %arg1: i32) -> (i32, i32) {
    %c0_i32 = arith.constant 0 : i32
    %c0_i32_0 = arith.constant 0 : i32
    %c0_i32_1 = arith.constant 0 : i32
    return %c0_i32, %c0_i32_0 : i32, i32
  }
  func.func @transform_5(%arg0: i32, %arg1: i32) -> (i32, i32) {
    %c0_i32 = arith.constant 0 : i32
    %c0_i32_0 = arith.constant 0 : i32
    %c0_i32_1 = arith.constant 0 : i32
    return %c0_i32, %c0_i32_0 : i32, i32
  }
  func.func @transform_6(%arg0: i32, %arg1: i32) -> (i32, i32) {
    %c0_i32 = arith.constant 0 : i32
    %c0_i32_0 = arith.constant 0 : i32
    %c0_i32_1 = arith.constant 0 : i32
    return %c0_i32, %c0_i32_0 : i32, i32
  }
  func.func @transform_7(%arg0: i32, %arg1: i32) -> (i32, i32) {
    %c0_i32 = arith.constant 0 : i32
    %c0_i32_0 = arith.constant 0 : i32
    return %arg0, %c0_i32 : i32, i32
  }
  func.func @transform_8(%arg0: i32, %arg1: i32) -> (i32, i32) {
    %c0_i32 = arith.constant 0 : i32
    %c0_i32_0 = arith.constant 0 : i32
    return %arg0, %c0_i32 : i32, i32
  }
}

</mosaic_0001>

<llo_original>
// kernel: tpu_custom_call.1
$region0: #{tpu_custom_call.1}
  #allocation0 [shape = 'u32[]', space=smem, size = 0x4, offset = 0x4, fixed_abs, tag = 'smem constant byte address 0x4 - core index']
  #allocation1 [shape = 'u32[144,128]{1,0:T(1,128)}', space=vmem, size = 0x12000, scoped, tag = 'internal scratch']
  #allocation2 [shape = 'f32[16,128]{1,0:T(8,128)}', space=vmem, size = 0x2000, scoped, tag = 'scratch operand']
  %s0 = inlined_call_operand.hbm [shape: bf16[32,256], index: 0, kind: input, shape index: {}]
  %s1 = inlined_call_operand.hbm [shape: bf16[256,128], index: 1, kind: input, shape index: {}]
  %s2 = inlined_call_operand.vmem [shape: f32[1,128], index: 2, kind: input, shape index: {}]
  %s3 = inlined_call_operand.hbm [shape: bf16[128,128], index: 3, kind: input, shape index: {}]
  %s4 = inlined_call_operand.vmem [shape: f32[1,128], index: 4, kind: input, shape index: {}]
  %s5 = inlined_call_operand.hbm [shape: bf16[128,256], index: 5, kind: input, shape index: {}]
  %s6 = inlined_call_operand.vmem [shape: f32[1,256], index: 6, kind: input, shape index: {}]
  %s7 = inlined_call_operand.hbm [shape: f32[32,128], index: 7, kind: input, shape index: {}]
  %s8 = inlined_call_operand.hbm [shape: f32[32,128], index: 8, kind: output, shape index: {}]
  %s9 = sld [smem:[#allocation0]]
  $region93: #{tpu_custom_call.1} parent=0
    _
  %s11 = ssub.s32 1, %s9
  %s12 = scalar_select 0, %s11, %s9
  $region1: #{tpu_custom_call.1} parent=0
    #allocation3 [shape = 'u8[8192]{0}', space=vmem, size = 0x2000, scoped, tag = 'input window, operand 0']
    #allocation4 [shape = 's32[2]{0}', space=sflag, size = 0x8, scoped, tag = 'scoped memory for tpu_custom_call.1']
    #allocation5 [shape = 's32[2]{0}', space=sflag, size = 0x8, scoped, tag = 'scoped memory for tpu_custom_call.1']
    #allocation6 [shape = 'u8[65536]{0}', space=vmem, size = 0x10000, scoped, tag = 'input window, operand 1']
    #allocation7 [shape = 's32[2]{0}', space=sflag, size = 0x8, scoped, tag = 'scoped memory for tpu_custom_call.1']
    #allocation8 [shape = 'u8[32768]{0}', space=vmem, size = 0x8000, scoped, tag = 'input window, operand 3, single buffered']
    #allocation9 [shape = 'u8[65536]{0}', space=vmem, size = 0x10000, scoped, tag = 'input window, operand 5, single buffered']
    #allocation10 [shape = 's32[1]{0}', space=sflag, size = 0x4, scoped, tag = 'scoped memory for tpu_custom_call.1']
    #allocation11 [shape = 'u8[16384]{0}', space=vmem, size = 0x4000, scoped, tag = 'input window, operand 7']
    #allocation12 [shape = 'u8[16384]{0}', space=vmem, size = 0x4000, scoped, tag = 'output window, operand 0']
    %13 = vsyncpa [#allocation4], 0
    %s14 = scalar_lea.sflag [#allocation4], 1
    %15 = vsyncpa %s14, 0
    %16 = vsyncpa [#allocation7], 0
    %s17 = scalar_lea.sflag [#allocation7], 1
    %18 = vsyncpa %s17, 0
    %19 = vsyncpa [#allocation10], 0
    %20 = vsyncpa [#allocation5], 0
    %s21 = scalar_lea.sflag [#allocation5], 1
    %22 = vsyncpa %s21, 0
    loop: start=0, step=1, limit=6
    $region2: #{tpu_custom_call.1} parent=1 // loop_pre_header
      _
    $region3: #{tpu_custom_call.1} parent=1 // loop_header
      %s24 = sphi 0, %s28
      %p25 = scmp.ge.s32.totalorder %s24, 6
      %s31 = sphi 0, %s43
      %s32 = sphi 0, %s39
      %s33 = sphi 0, %s31
      %s34 = sphi 0, %s32
      %s35 = sphi 0, %s33
      %s36 = sphi 0, %s34
      %s48 = sphi 0, %s50
      %s51 = sphi 0, %s48
      %s52 = sphi 0, %s51
      %s68 = sphi 0, %s52
      %s74 = sphi 0, %s76
      %s77 = sphi 0, %s74
      %s78 = sphi 0, %s77
      %s94 = sphi 0, %s78
      %s98 = sphi 0, %s98
      %s100 = sphi 0, %s98
      %s101 = sphi 0, %s100
      %s115 = sphi 0, %s101
      %s119 = sphi 0, %s119
      %s121 = sphi 0, %s119
      %s122 = sphi 0, %s121
      %s136 = sphi 0, %s122
      %s140 = sphi 0, %s140
      %s142 = sphi 0, %s140
      %s143 = sphi 0, %s142
      %s157 = sphi 0, %s143
      %s161 = sphi 0, %s161
      %s163 = sphi 0, %s161
      %s164 = sphi 0, %s163
      %s178 = sphi 0, %s164
      %s182 = sphi 0, %s182
      %s184 = sphi 0, %s182
      %s185 = sphi 0, %s184
      %s199 = sphi 0, %s185
      %s205 = sphi 0, %s207
      %s208 = sphi 0, %s205
      %s209 = sphi 0, %s208
      %s225 = sphi 0, %s209
      %s231 = sphi 0, %s233
      %s234 = sphi 0, %s231
      %s235 = sphi 0, %s234
      %s251 = sphi 0, %s235
    $region4: #{tpu_custom_call.1} parent=1 // loop_header_branch
      %27 = sbr.rel (%p25) target = $region8
    $region5: #{tpu_custom_call.1} parent=1 // loop_body
      %s29 = ssub.s32 %s24, 1
      %s30 = ssub.s32 %s24, 2
      %s37 = sadd.s32 1, %s32
      %p38 = scmp.ge.s32.totalorder %s37, 2
      %s39 = scalar_select %p38, 0, %s37
      %s40 = sadd.s32 1, %s31
      %s41 = scalar_select %p38, %s40, %s31
      %p42 = scmp.ge.s32.totalorder %s41, 2
      %s43 = scalar_select %p42, 0, %s41
      %s44 = ssub.s32 %s31, %s43
      %s45 = ssub.s32 %s32, %s39
      %s46 = sor.u32 %s44, %s45
      %p47 = scmp.eq.s32.totalorder %s46, 0
      %s49 = sadd.s32 %s48, 1
      %s50 = scalar_select %p47, %s48, %s49
      %p53 = pneg %p47
      %p54 = scmp.eq.s32.totalorder %s24, 3
      %p55 = por %p53, %p54
      %p56 = scmp.ne.s32.totalorder %s48, %s51
      %p57 = scmp.eq.s32.totalorder %s24, 0
      %p58 = por %p56, %p57
      %p59 = scmp.ne.s32.totalorder %s48, %s51
      %p60 = scmp.eq.s32.totalorder %s29, 3
      %p61 = por %p59, %p60
      %p62 = scmp.ne.s32.totalorder %s51, %s52
      %p63 = scmp.eq.s32.totalorder %s29, 0
      %p64 = por %p62, %p63
      %p65 = scmp.ne.s32.totalorder %s51, %s52
      %p66 = scmp.eq.s32.totalorder %s30, 3
      %p67 = por %p65, %p66
      %p69 = scmp.ne.s32.totalorder %s52, %s68
      %p70 = scmp.eq.s32.totalorder %s30, 0
      %p71 = por %p69, %p70
      %s72 = ssub.s32 %s32, %s39
      %p73 = scmp.eq.s32.totalorder %s72, 0
      %s75 = sadd.s32 %s74, 1
      %s76 = scalar_select %p73, %s74, %s75
      %p79 = pneg %p73
      %p80 = scmp.eq.s32.totalorder %s24, 3
      %p81 = por %p79, %p80
      %p82 = scmp.ne.s32.totalorder %s74, %s77
      %p83 = scmp.eq.s32.totalorder %s24, 0
      %p84 = por %p82, %p83
      %p85 = scmp.ne.s32.totalorder %s74, %s77
      %p86 = scmp.eq.s32.totalorder %s29, 3
      %p87 = por %p85, %p86
      %p88 = scmp.ne.s32.totalorder %s77, %s78
      %p89 = scmp.eq.s32.totalorder %s29, 0
      %p90 = por %p88, %p89
      %p91 = scmp.ne.s32.totalorder %s77, %s78
      %p92 = scmp.eq.s32.totalorder %s30, 3
      %p93 = por %p91, %p92
      %p95 = scmp.ne.s32.totalorder %s78, %s94
      %p96 = scmp.eq.s32.totalorder %s30, 0
      %p97 = por %p95, %p96
      %s99 = sadd.s32 %s98, 1
      %p102 = scmp.eq.s32.totalorder %s24, 3
      %p103 = scmp.ne.s32.totalorder %s98, %s100
      %p104 = scmp.eq.s32.totalorder %s24, 0
      %p105 = por %p103, %p104
      %p106 = scmp.ne.s32.totalorder %s98, %s100
      %p107 = scmp.eq.s32.totalorder %s29, 3
      %p108 = por %p106, %p107
      %p109 = scmp.ne.s32.totalorder %s100, %s101
      %p110 = scmp.eq.s32.totalorder %s29, 0
      %p111 = por %p109, %p110
      %p112 = scmp.ne.s32.totalorder %s100, %s101
      %p113 = scmp.eq.s32.totalorder %s30, 3
      %p114 = por %p112, %p113
      %p116 = scmp.ne.s32.totalorder %s101, %s115
      %p117 = scmp.eq.s32.totalorder %s30, 0
      %p118 = por %p116, %p117
      %s120 = sadd.s32 %s119, 1
      %p123 = scmp.eq.s32.totalorder %s24, 3
      %p124 = scmp.ne.s32.totalorder %s119, %s121
      %p125 = scmp.eq.s32.totalorder %s24, 0
      %p126 = por %p124, %p125
      %p127 = scmp.ne.s32.totalorder %s119, %s121
      %p128 = scmp.eq.s32.totalorder %s29, 3
      %p129 = por %p127, %p128
      %p130 = scmp.ne.s32.totalorder %s121, %s122
      %p131 = scmp.eq.s32.totalorder %s29, 0
      %p132 = por %p130, %p131
      %p133 = scmp.ne.s32.totalorder %s121, %s122
      %p134 = scmp.eq.s32.totalorder %s30, 3
      %p135 = por %p133, %p134
      %p137 = scmp.ne.s32.totalorder %s122, %s136
      %p138 = scmp.eq.s32.totalorder %s30, 0
      %p139 = por %p137, %p138
      %s141 = sadd.s32 %s140, 1
      %p144 = scmp.eq.s32.totalorder %s24, 3
      %p145 = scmp.ne.s32.totalorder %s140, %s142
      %p146 = scmp.eq.s32.totalorder %s24, 0
      %p147 = por %p145, %p146
      %p148 = scmp.ne.s32.totalorder %s140, %s142
      %p149 = scmp.eq.s32.totalorder %s29, 3
      %p150 = por %p148, %p149
      %p151 = scmp.ne.s32.totalorder %s142, %s143
      %p152 = scmp.eq.s32.totalorder %s29, 0
      %p153 = por %p151, %p152
      %p154 = scmp.ne.s32.totalorder %s142, %s143
      %p155 = scmp.eq.s32.totalorder %s30, 3
      %p156 = por %p154, %p155
      %p158 = scmp.ne.s32.totalorder %s143, %s157
      %p159 = scmp.eq.s32.totalorder %s30, 0
      %p160 = por %p158, %p159
      %s162 = sadd.s32 %s161, 1
      %p165 = scmp.eq.s32.totalorder %s24, 3
      %p166 = scmp.ne.s32.totalorder %s161, %s163
      %p167 = scmp.eq.s32.totalorder %s24, 0
      %p168 = por %p166, %p167
      %p169 = scmp.ne.s32.totalorder %s161, %s163
      %p170 = scmp.eq.s32.totalorder %s29, 3
      %p171 = por %p169, %p170
      %p172 = scmp.ne.s32.totalorder %s163, %s164
      %p173 = scmp.eq.s32.totalorder %s29, 0
      %p174 = por %p172, %p173
      %p175 = scmp.ne.s32.totalorder %s163, %s164
      %p176 = scmp.eq.s32.totalorder %s30, 3
      %p177 = por %p175, %p176
      %p179 = scmp.ne.s32.totalorder %s164, %s178
      %p180 = scmp.eq.s32.totalorder %s30, 0
      %p181 = por %p179, %p180
      %s183 = sadd.s32 %s182, 1
      %p186 = scmp.eq.s32.totalorder %s24, 3
      %p187 = scmp.ne.s32.totalorder %s182, %s184
      %p188 = scmp.eq.s32.totalorder %s24, 0
      %p189 = por %p187, %p188
      %p190 = scmp.ne.s32.totalorder %s182, %s184
      %p191 = scmp.eq.s32.totalorder %s29, 3
      %p192 = por %p190, %p191
      %p193 = scmp.ne.s32.totalorder %s184, %s185
      %p194 = scmp.eq.s32.totalorder %s29, 0
      %p195 = por %p193, %p194
      %p196 = scmp.ne.s32.totalorder %s184, %s185
      %p197 = scmp.eq.s32.totalorder %s30, 3
      %p198 = por %p196, %p197
      %p200 = scmp.ne.s32.totalorder %s185, %s199
      %p201 = scmp.eq.s32.totalorder %s30, 0
      %p202 = por %p200, %p201
      %s203 = ssub.s32 %s31, %s43
      %p204 = scmp.eq.s32.totalorder %s203, 0
      %s206 = sadd.s32 %s205, 1
      %s207 = scalar_select %p204, %s205, %s206
      %p210 = pneg %p204
      %p211 = scmp.eq.s32.totalorder %s24, 3
      %p212 = por %p210, %p211
      %p213 = scmp.ne.s32.totalorder %s205, %s208
      %p214 = scmp.eq.s32.totalorder %s24, 0
      %p215 = por %p213, %p214
      %p216 = scmp.ne.s32.totalorder %s205, %s208
      %p217 = scmp.eq.s32.totalorder %s29, 3
      %p218 = por %p216, %p217
      %p219 = scmp.ne.s32.totalorder %s208, %s209
      %p220 = scmp.eq.s32.totalorder %s29, 0
      %p221 = por %p219, %p220
      %p222 = scmp.ne.s32.totalorder %s208, %s209
      %p223 = scmp.eq.s32.totalorder %s30, 3
      %p224 = por %p222, %p223
      %p226 = scmp.ne.s32.totalorder %s209, %s225
      %p227 = scmp.eq.s32.totalorder %s30, 0
      %p228 = por %p226, %p227
      %s229 = ssub.s32 %s31, %s43
      %p230 = scmp.eq.s32.totalorder %s229, 0
      %s232 = sadd.s32 %s231, 1
      %s233 = scalar_select %p230, %s231, %s232
      %p236 = pneg %p230
      %p237 = scmp.eq.s32.totalorder %s24, 3
      %p238 = por %p236, %p237
      %p239 = scmp.ne.s32.totalorder %s231, %s234
      %p240 = scmp.eq.s32.totalorder %s24, 0
      %p241 = por %p239, %p240
      %p242 = scmp.ne.s32.totalorder %s231, %s234
      %p243 = scmp.eq.s32.totalorder %s29, 3
      %p244 = por %p242, %p243
      %p245 = scmp.ne.s32.totalorder %s234, %s235
      %p246 = scmp.eq.s32.totalorder %s29, 0
      %p247 = por %p245, %p246
      %p248 = scmp.ne.s32.totalorder %s234, %s235
      %p249 = scmp.eq.s32.totalorder %s30, 3
      %p250 = por %p248, %p249
      %p252 = scmp.ne.s32.totalorder %s235, %s251
      %p253 = scmp.eq.s32.totalorder %s30, 0
      %p254 = por %p252, %p253
      %p255 = scmp.le.s32.totalorder 1, %s24
      %p256 = scmp.lt.s32.totalorder %s24, 5
      %p257 = pnand %p255, %p256
      %p258 = pneg %p257
      // Predicated region
      $region9: #{tpu_custom_call.1} parent=5 // pred_check
        _
      $region10: #{tpu_custom_call.1} parent=5 // pred_check_branch
        %260 = sbr.rel (%p257) target = $region12
      $region11: #{tpu_custom_call.1} parent=5 // pred_region
        %s261 = ssub.s32 %s24, 1
        // Predicated region
        $region13: #{tpu_custom_call.1} parent=11 // pred_check
          %p262 = pneg %p111
        $region14: #{tpu_custom_call.1} parent=11 // pred_check_branch
          %264 = sbr.rel (%p262) target = $region16
        $region15: #{tpu_custom_call.1} parent=11 // pred_region
          _
        $region16: #{tpu_custom_call.1} parent=11 // pred_fallthru
          _
        // Predicated region
        $region17: #{tpu_custom_call.1} parent=11 // pred_check
          %p265 = pneg %p132
        $region18: #{tpu_custom_call.1} parent=11 // pred_check_branch
          %267 = sbr.rel (%p265) target = $region20
        $region19: #{tpu_custom_call.1} parent=11 // pred_region
          %s269 = ssub.s32 1024, 1024
          %270 = vsyncadd [#allocation7], %s269
          %s271 = sshll.u32 [#allocation8], 4
          %s272 = int_to_ptr.vmem [resolvable:$true] %s271
          %277 = dma.hbm_to_vmem [thread:$0]  %s3, 1024, %s272, [#allocation7], 64, 64, 4
        $region20: #{tpu_custom_call.1} parent=11 // pred_fallthru
          _
        // Predicated region
        $region21: #{tpu_custom_call.1} parent=11 // pred_check
          %p278 = pneg %p153
        $region22: #{tpu_custom_call.1} parent=11 // pred_check_branch
          %280 = sbr.rel (%p278) target = $region24
        $region23: #{tpu_custom_call.1} parent=11 // pred_region
          _
        $region24: #{tpu_custom_call.1} parent=11 // pred_fallthru
          _
        // Predicated region
        $region25: #{tpu_custom_call.1} parent=11 // pred_check
          %p281 = pneg %p174
        $region26: #{tpu_custom_call.1} parent=11 // pred_check_branch
          %283 = sbr.rel (%p281) target = $region28
        $region27: #{tpu_custom_call.1} parent=11 // pred_region
          %s285 = ssub.s32 2048, 2048
          %286 = vsyncadd [#allocation10], %s285
          %s287 = sshll.u32 [#allocation9], 4
          %s288 = int_to_ptr.vmem [resolvable:$true] %s287
          %293 = dma.hbm_to_vmem [thread:$0]  %s5, 2048, %s288, [#allocation10], 128, 128, 8
        $region28: #{tpu_custom_call.1} parent=11 // pred_fallthru
          _
        // Predicated region
        $region29: #{tpu_custom_call.1} parent=11 // pred_check
          %p294 = pneg %p195
        $region30: #{tpu_custom_call.1} parent=11 // pred_check_branch
          %296 = sbr.rel (%p294) target = $region32
        $region31: #{tpu_custom_call.1} parent=11 // pred_region
          _
        $region32: #{tpu_custom_call.1} parent=11 // pred_fallthru
          _
      $region12: #{tpu_custom_call.1} parent=5 // pred_fallthru
        _
      %p297 = scmp.lt.s32.totalorder %s24, 4
      // Predicated region
      $region33: #{tpu_custom_call.1} parent=5 // pred_check
        %p298 = pneg %p297
      $region34: #{tpu_custom_call.1} parent=5 // pred_check_branch
        %300 = sbr.rel (%p298) target = $region36
      $region35: #{tpu_custom_call.1} parent=5 // pred_region
        // Predicated region
        $region37: #{tpu_custom_call.1} parent=35 // pred_check
          %p301 = pneg %p58
        $region38: #{tpu_custom_call.1} parent=35 // pred_check_branch
          %303 = sbr.rel (%p301) target = $region40
        $region39: #{tpu_custom_call.1} parent=35 // pred_region
          %s304 = sand.u32 %s24, 1
          %s305 = scalar_lea.sflag [#allocation4], %s304
          %s306 = sand.u32 %s48, 1
          %s307 = smul.addr %s306, 8
          %s308 = scalar_lea.vmem [#allocation3], %s307
          %s309 = smul.u32 2, %s31
          %s311 = ssub.s32 128, 128
          %312 = vsyncadd %s305, %s311
          %s313 = smul.addr %s309, 2
          %s314 = sadd.s32 %s32, %s313
          %s315 = smul.addr %s314, 64
          %s316 = scalar_lea.hbm %s0, %s315
          %s317 = sshll.u32 %s308, 4
          %s318 = int_to_ptr.vmem [resolvable:$true] %s317
          %323 = dma.hbm_to_vmem [thread:$0]  %s316, 128, %s318, %s305, 128, 64, 4
        $region40: #{tpu_custom_call.1} parent=35 // pred_fallthru
          _
        // Predicated region
        $region41: #{tpu_custom_call.1} parent=35 // pred_check
          %p324 = pneg %p84
        $region42: #{tpu_custom_call.1} parent=35 // pred_check_branch
          %326 = sbr.rel (%p324) target = $region44
        $region43: #{tpu_custom_call.1} parent=35 // pred_region
          %s327 = sand.u32 %s24, 1
          %s328 = scalar_lea.sflag [#allocation7], %s327
          %s329 = sand.u32 %s74, 1
          %s330 = smul.addr %s329, 64
          %s331 = scalar_lea.vmem [#allocation6], %s330
          %s332 = smul.u32 16, %s32
          %s334 = ssub.s32 1024, 1024
          %335 = vsyncadd %s328, %s334
          %s336 = smul.addr %s332, 64
          %s337 = scalar_lea.hbm %s1, %s336
          %s338 = sshll.u32 %s331, 4
          %s339 = int_to_ptr.vmem [resolvable:$true] %s338
          %344 = dma.hbm_to_vmem [thread:$0]  %s337, 1024, %s339, %s328, 64, 64, 4
        $region44: #{tpu_custom_call.1} parent=35 // pred_fallthru
          _
        // Predicated region
        $region45: #{tpu_custom_call.1} parent=35 // pred_check
          %p345 = pneg %p215
        $region46: #{tpu_custom_call.1} parent=35 // pred_check_branch
          %347 = sbr.rel (%p345) target = $region48
        $region47: #{tpu_custom_call.1} parent=35 // pred_region
          %s348 = sand.u32 %s24, 1
          %s349 = scalar_lea.sflag [#allocation4], %s348
          %s350 = sand.u32 %s205, 1
          %s351 = smul.addr %s350, 16
          %s352 = scalar_lea.vmem [#allocation11], %s351
          %s353 = smul.u32 2, %s31
          %s355 = ssub.s32 256, 256
          %356 = vsyncadd %s349, %s355
          %s357 = smul.addr %s353, 128
          %s358 = scalar_lea.hbm %s7, %s357
          %s359 = sshll.u32 %s352, 4
          %s360 = int_to_ptr.vmem [resolvable:$true] %s359
          %365 = dma.hbm_to_vmem [thread:$0]  %s358, 256, %s360, %s349, 128, 128, 8
        $region48: #{tpu_custom_call.1} parent=35 // pred_fallthru
          _
      $region36: #{tpu_custom_call.1} parent=5 // pred_fallthru
        _
      %p366 = scmp.le.s32.totalorder 1, %s24
      %p367 = scmp.lt.s32.totalorder %s24, 5
      %p368 = pnand %p366, %p367
      %p369 = pneg %p368
      // Predicated region
      $region49: #{tpu_custom_call.1} parent=5 // pred_check
        _
      $region50: #{tpu_custom_call.1} parent=5 // pred_check_branch
        %371 = sbr.rel (%p368) target = $region52
      $region51: #{tpu_custom_call.1} parent=5 // pred_region
        %s372 = ssub.s32 %s24, 1
        %s373 = sand.u32 %s29, 1
        %s374 = scalar_lea.sflag [#allocation4], %s373
        %s375 = sand.u32 %s51, 1
        %s376 = smul.addr %s375, 8
        %s377 = scalar_lea.vmem [#allocation3], %s376
        // Predicated region
        $region53: #{tpu_custom_call.1} parent=51 // pred_check
          %p378 = pneg %p64
        $region54: #{tpu_custom_call.1} parent=51 // pred_check_branch
          %380 = sbr.rel (%p378) target = $region56
        $region55: #{tpu_custom_call.1} parent=51 // pred_region
          %381 = dma.done %s374, 128
        $region56: #{tpu_custom_call.1} parent=51 // pred_fallthru
          _
        %s382 = sand.u32 %s29, 1
        %s383 = scalar_lea.sflag [#allocation7], %s382
        %s384 = sand.u32 %s77, 1
        %s385 = smul.addr %s384, 64
        %s386 = scalar_lea.vmem [#allocation6], %s385
        // Predicated region
        $region57: #{tpu_custom_call.1} parent=51 // pred_check
          %p387 = pneg %p90
        $region58: #{tpu_custom_call.1} parent=51 // pred_check_branch
          %389 = sbr.rel (%p387) target = $region60
        $region59: #{tpu_custom_call.1} parent=51 // pred_region
          %390 = dma.done %s383, 1024
        $region60: #{tpu_custom_call.1} parent=51 // pred_fallthru
          _
        // Predicated region
        $region61: #{tpu_custom_call.1} parent=51 // pred_check
          %p391 = pneg %p132
        $region62: #{tpu_custom_call.1} parent=51 // pred_check_branch
          %393 = sbr.rel (%p391) target = $region64
        $region63: #{tpu_custom_call.1} parent=51 // pred_region
          %394 = dma.done [#allocation7], 1024
        $region64: #{tpu_custom_call.1} parent=51 // pred_fallthru
          _
        // Predicated region
        $region65: #{tpu_custom_call.1} parent=51 // pred_check
          %p395 = pneg %p174
        $region66: #{tpu_custom_call.1} parent=51 // pred_check_branch
          %397 = sbr.rel (%p395) target = $region68
        $region67: #{tpu_custom_call.1} parent=51 // pred_region
          %398 = dma.done [#allocation10], 2048
        $region68: #{tpu_custom_call.1} parent=51 // pred_fallthru
          _
        %s399 = sand.u32 %s29, 1
        %s400 = scalar_lea.sflag [#allocation4], %s399
        %s401 = sand.u32 %s208, 1
        %s402 = smul.addr %s401, 16
        %s403 = scalar_lea.vmem [#allocation11], %s402
        // Predicated region
        $region69: #{tpu_custom_call.1} parent=51 // pred_check
          %p404 = pneg %p221
        $region70: #{tpu_custom_call.1} parent=51 // pred_check_branch
          %406 = sbr.rel (%p404) target = $region72
        $region71: #{tpu_custom_call.1} parent=51 // pred_region
          %407 = dma.done %s400, 256
        $region72: #{tpu_custom_call.1} parent=51 // pred_fallthru
          _
        %s408 = sand.u32 %s29, 1
        %s409 = scalar_lea.sflag [#allocation4], %s408
        %s410 = sand.u32 %s51, 1
        %s411 = smul.addr %s410, 8
        %s412 = scalar_lea.vmem [#allocation3], %s411
        %p413 = pneg %p64
        %p414 = pneg %p61
        %s415 = sand.u32 %s29, 1
        %s416 = scalar_lea.sflag [#allocation7], %s415
        %s417 = sand.u32 %s77, 1
        %s418 = smul.addr %s417, 64
        %s419 = scalar_lea.vmem [#allocation6], %s418
        %p420 = pneg %p90
        %p421 = pneg %p87
        %p422 = pneg %p111
        %p423 = pneg %p108
        %p424 = pneg %p132
        %p425 = pneg %p129
        %p426 = pneg %p153
        %p427 = pneg %p150
        %p428 = pneg %p174
        %p429 = pneg %p171
        %p430 = pneg %p195
        %p431 = pneg %p192
        %s432 = sand.u32 %s29, 1
        %s433 = scalar_lea.sflag [#allocation4], %s432
        %s434 = sand.u32 %s208, 1
        %s435 = smul.addr %s434, 16
        %s436 = scalar_lea.vmem [#allocation11], %s435
        %p437 = pneg %p221
        %p438 = pneg %p218
        %p439 = pneg %p247
        %p440 = pneg %p244
        %s441 = sand.u32 %s234, 1
        %s442 = scalar_lea.sflag [#allocation5], %s441
        %s443 = sand.u32 %s234, 1
        %s444 = smul.addr %s443, 16
        %s445 = scalar_lea.vmem [#allocation12], %s444
        %s446 = smul.u32 2, %s33
        %s447 = smul.u32 16, %s34
        %s448 = smul.u32 2, %s33
        %s449 = smul.u32 2, %s33
        %p451 = scmp.eq.s32.totalorder %s34, 0
        // Predicated region
        $region73: #{tpu_custom_call.1} parent=51 // pred_check
          %p452 = pneg %p451
        $region74: #{tpu_custom_call.1} parent=51 // pred_check_branch
          %454 = sbr.rel (%p452) target = $region76
        $region75: #{tpu_custom_call.1} parent=51 // pred_region
          %455 = vst [vmem:[#allocation2] sm:$0xff] 0.0
          %456 = vst [vmem:[#allocation2 + $0x8] sm:$0xff] 0.0
        $region76: #{tpu_custom_call.1} parent=51 // pred_fallthru
          _
        %v457 = vld [vmem:[#allocation2] sm:$0xff]
        %v458 = vld [vmem:[#allocation2 + $0x8] sm:$0xff]
        %v459 = vld [vmem:[%s377] sm:$0xf]
        %v460 = vld [vmem:[%s377 + $0x4] sm:$0xf]
        %v461 = vld [vmem:[%s386] sm:$0xf]
        %v462 = vld [vmem:[%s386 + $0x4] sm:$0xf]
        %v463 = vld [vmem:[%s386 + $0x8] sm:$0xf]
        %v464 = vld [vmem:[%s386 + $0xc] sm:$0xf]
        %v465 = vld [vmem:[%s386 + $0x10] sm:$0xf]
        %v466 = vld [vmem:[%s386 + $0x14] sm:$0xf]
        %v467 = vld [vmem:[%s386 + $0x18] sm:$0xf]
        %v468 = vld [vmem:[%s386 + $0x1c] sm:$0xf]
        %v469 = vld [vmem:[%s386 + $0x20] sm:$0xf]
        %v470 = vld [vmem:[%s386 + $0x24] sm:$0xf]
        %v471 = vld [vmem:[%s386 + $0x28] sm:$0xf]
        %v472 = vld [vmem:[%s386 + $0x2c] sm:$0xf]
        %v473 = vld [vmem:[%s386 + $0x30] sm:$0xf]
        %v474 = vld [vmem:[%s386 + $0x34] sm:$0xf]
        %v475 = vld [vmem:[%s386 + $0x38] sm:$0xf]
        %v476 = vld [vmem:[%s386 + $0x3c] sm:$0xf]
        %v479 = vunpack.c.l.b16 %v459
        %v480 = vunpack.c.l.b16 %v460
        %v481 = vpack.c.b16 %v480, %v479
        %v499 = vunpack.c.l.b16 %v461
        %v500 = vunpack.c.l.b16 %v462
        %v501 = vunpack.c.l.b16 %v463
        %v502 = vunpack.c.l.b16 %v464
        %v503 = vunpack.c.l.b16 %v465
        %v504 = vunpack.c.l.b16 %v466
        %v505 = vunpack.c.l.b16 %v467
        %v506 = vunpack.c.l.b16 %v468
        %v507 = vunpack.c.l.b16 %v469
        %v508 = vunpack.c.l.b16 %v470
        %v509 = vunpack.c.l.b16 %v471
        %v510 = vunpack.c.l.b16 %v472
        %v511 = vunpack.c.l.b16 %v473
        %v512 = vunpack.c.l.b16 %v474
        %v513 = vunpack.c.l.b16 %v475
        %v514 = vunpack.c.l.b16 %v476
        %v515 = vpack.c.b16 %v500, %v499
        %v516 = vpack.c.b16 %v502, %v501
        %v517 = vpack.c.b16 %v504, %v503
        %v518 = vpack.c.b16 %v506, %v505
        %v519 = vpack.c.b16 %v508, %v507
        %v520 = vpack.c.b16 %v510, %v509
        %v521 = vpack.c.b16 %v512, %v511
        %v522 = vpack.c.b16 %v514, %v513
        %531 = vmatprep.subr.bf16.mxu0 0
        %532 = vmatpush1.bf16.msra.mxu0 %v515
        %533 = vmatprep.subr.bf16.mxu0 0
        %534 = vmatpush1.bf16.msra.mxu0 %v516
        %535 = vmatprep.subr.bf16.mxu0 0
        %536 = vmatpush1.bf16.msra.mxu0 %v517
        %537 = vmatprep.subr.bf16.mxu0 0
        %538 = vmatpush1.bf16.msra.mxu0 %v518
        %539 = vmatprep.subr.bf16.mxu0 0
        %540 = vmatpush1.bf16.msra.mxu0 %v519
        %541 = vmatprep.subr.bf16.mxu0 0
        %542 = vmatpush1.bf16.msra.mxu0 %v520
        %543 = vmatprep.subr.bf16.mxu0 0
        %544 = vmatpush1.bf16.msra.mxu0 %v521
        %545 = vmatprep.subr.bf16.mxu0 0
        %546 = vmatpush1.bf16.msra.mxu0 %v522
        %547 = vmatprep.subr.bf16.mxu0 0
        %548 = vmatpush1.bf16.msra.mxu0 0
        %549 = vmatprep.subr.bf16.mxu0 0
        %550 = vmatpush1.bf16.msra.mxu0 0
        %551 = vmatprep.subr.bf16.mxu0 0
        %552 = vmatpush1.bf16.msra.mxu0 0
        %553 = vmatprep.subr.bf16.mxu0 0
        %554 = vmatpush1.bf16.msra.mxu0 0
        %555 = vmatprep.subr.bf16.mxu0 0
        %556 = vmatpush1.bf16.msra.mxu0 0
        %557 = vmatprep.subr.bf16.mxu0 0
        %558 = vmatpush1.bf16.msra.mxu0 0
        %559 = vmatprep.subr.bf16.mxu0 0
        %560 = vmatpush1.bf16.msra.mxu0 0
        %561 = vmatprep.subr.bf16.mxu0 0
        %562 = vmatpush1.bf16.msra.mxu0 0
        %563 = vmatprep.mubr.bf16.mxu0 0
        %564 = vmatmul.mubr.bf16.gmra.mrb[0].mxu0 %v481
        %v565 = vpop.f32.mrb[0].mxu0
        %v566 = vadd.f32 0.0, %v565
        %v567 = vpop.f32.mrb[0].mxu0
        %v568 = vpop.f32.mrb[0].mxu0
        %v569 = vadd.f32 0.0, %v568
        %v570 = vpop.f32.mrb[0].mxu0
        %571 = vdwg.mxu0
        %v572 = vadd.f32 %v457, %v566
        %v573 = vadd.f32 %v458, %v569
        %574 = vst [vmem:[#allocation2] sm:$0xff] %v572
        %575 = vst [vmem:[#allocation2 + $0x8] sm:$0xff] %v573
        %p576 = scmp.eq.s32.totalorder %s34, 1
        // Predicated region
        $region77: #{tpu_custom_call.1} parent=51 // pred_check
          %p577 = pneg %p576
        $region78: #{tpu_custom_call.1} parent=51 // pred_check_branch
          %579 = sbr.rel (%p577) target = $region80
        $region79: #{tpu_custom_call.1} parent=51 // pred_region
          %v580 = vld [vmem:[#allocation2] sm:$0xff]
          %v581 = vld [vmem:[#allocation2 + $0x8] sm:$0xff]
          %v582 = vld [vmem:[%s2] sm:$0x1]
          %v584 = vlaneseq
          %v585 = vshrl.u32 %v584, 7
          %v586 = vsub.s32 0, %v585
          %v587 = vrot.slane %v582, %v586
          %v589 = vadd.f32 %v580, %v587
          %v590 = vadd.f32 %v581, %v587
          %v591 = vmax.f32 %v589, 0.0
          %v592 = vmax.f32 %v590, 0.0
          %v593 = vpack.c.bf16 %v592, %v591
          %v594 = vld [vmem:[#allocation8] sm:$0xf]
          %v595 = vld [vmem:[#allocation8 + $0x4] sm:$0xf]
          %v596 = vld [vmem:[#allocation8 + $0x8] sm:$0xf]
          %v597 = vld [vmem:[#allocation8 + $0xc] sm:$0xf]
          %v598 = vld [vmem:[#allocation8 + $0x10] sm:$0xf]
          %v599 = vld [vmem:[#allocation8 + $0x14] sm:$0xf]
          %v600 = vld [vmem:[#allocation8 + $0x18] sm:$0xf]
          %v601 = vld [vmem:[#allocation8 + $0x1c] sm:$0xf]
          %v602 = vld [vmem:[#allocation8 + $0x20] sm:$0xf]
          %v603 = vld [vmem:[#allocation8 + $0x24] sm:$0xf]
          %v604 = vld [vmem:[#allocation8 + $0x28] sm:$0xf]
          %v605 = vld [vmem:[#allocation8 + $0x2c] sm:$0xf]
          %v606 = vld [vmem:[#allocation8 + $0x30] sm:$0xf]
          %v607 = vld [vmem:[#allocation8 + $0x34] sm:$0xf]
          %v608 = vld [vmem:[#allocation8 + $0x38] sm:$0xf]
          %v609 = vld [vmem:[#allocation8 + $0x3c] sm:$0xf]
          %v610 = vld [vmem:[%s4] sm:$0x1]
          %v612 = vlaneseq
          %v613 = vshrl.u32 %v612, 7
          %v614 = vsub.s32 0, %v613
          %v615 = vrot.slane %v610, %v614
          %v633 = vunpack.c.l.b16 %v594
          %v634 = vunpack.c.l.b16 %v595
          %v635 = vunpack.c.l.b16 %v596
          %v636 = vunpack.c.l.b16 %v597
          %v637 = vunpack.c.l.b16 %v598
          %v638 = vunpack.c.l.b16 %v599
          %v639 = vunpack.c.l.b16 %v600
          %v640 = vunpack.c.l.b16 %v601
          %v641 = vunpack.c.l.b16 %v602
          %v642 = vunpack.c.l.b16 %v603
          %v643 = vunpack.c.l.b16 %v604
          %v644 = vunpack.c.l.b16 %v605
          %v645 = vunpack.c.l.b16 %v606
          %v646 = vunpack.c.l.b16 %v607
          %v647 = vunpack.c.l.b16 %v608
          %v648 = vunpack.c.l.b16 %v609
          %v649 = vpack.c.b16 %v634, %v633
          %v650 = vpack.c.b16 %v636, %v635
          %v651 = vpack.c.b16 %v638, %v637
          %v652 = vpack.c.b16 %v640, %v639
          %v653 = vpack.c.b16 %v642, %v641
          %v654 = vpack.c.b16 %v644, %v643
          %v655 = vpack.c.b16 %v646, %v645
          %v656 = vpack.c.b16 %v648, %v647
          %665 = vmatprep.subr.bf16.mxu0 0
          %666 = vmatpush1.bf16.msra.mxu0 %v649
          %667 = vmatprep.subr.bf16.mxu0 0
          %668 = vmatpush1.bf16.msra.mxu0 %v650
          %669 = vmatprep.subr.bf16.mxu0 0
          %670 = vmatpush1.bf16.msra.mxu0 %v651
          %671 = vmatprep.subr.bf16.mxu0 0
          %672 = vmatpush1.bf16.msra.mxu0 %v652
          %673 = vmatprep.subr.bf16.mxu0 0
          %674 = vmatpush1.bf16.msra.mxu0 %v653
          %675 = vmatprep.subr.bf16.mxu0 0
          %676 = vmatpush1.bf16.msra.mxu0 %v654
          %677 = vmatprep.subr.bf16.mxu0 0
          %678 = vmatpush1.bf16.msra.mxu0 %v655
          %679 = vmatprep.subr.bf16.mxu0 0
          %680 = vmatpush1.bf16.msra.mxu0 %v656
          %681 = vmatprep.subr.bf16.mxu0 0
          %682 = vmatpush1.bf16.msra.mxu0 0
          %683 = vmatprep.subr.bf16.mxu0 0
          %684 = vmatpush1.bf16.msra.mxu0 0
          %685 = vmatprep.subr.bf16.mxu0 0
          %686 = vmatpush1.bf16.msra.mxu0 0
          %687 = vmatprep.subr.bf16.mxu0 0
          %688 = vmatpush1.bf16.msra.mxu0 0
          %689 = vmatprep.subr.bf16.mxu0 0
          %690 = vmatpush1.bf16.msra.mxu0 0
          %691 = vmatprep.subr.bf16.mxu0 0
          %692 = vmatpush1.bf16.msra.mxu0 0
          %693 = vmatprep.subr.bf16.mxu0 0
          %694 = vmatpush1.bf16.msra.mxu0 0
          %695 = vmatprep.subr.bf16.mxu0 0
          %696 = vmatpush1.bf16.msra.mxu0 0
          %697 = vmatprep.mubr.bf16.mxu0 0
          %698 = vmatmul.mubr.bf16.gmra.mrb[0].mxu0 %v593
          %v699 = vpop.f32.mrb[0].mxu0
          %v700 = vadd.f32 %v615, %v699
          %v701 = vpop.f32.mrb[0].mxu0
          %v702 = vpop.f32.mrb[0].mxu0
          %v703 = vadd.f32 %v615, %v702
          %v704 = vpop.f32.mrb[0].mxu0
          %705 = vdwg.mxu0
          %v706 = vpack.c.bf16 %v703, %v700
          %v707 = vld [vmem:[#allocation9] sm:$0xff]
          %v708 = vld [vmem:[#allocation9 + $0x8] sm:$0xff]
          %v709 = vld [vmem:[#allocation9 + $0x10] sm:$0xff]
          %v710 = vld [vmem:[#allocation9 + $0x18] sm:$0xff]
          %v711 = vld [vmem:[#allocation9 + $0x20] sm:$0xff]
          %v712 = vld [vmem:[#allocation9 + $0x28] sm:$0xff]
          %v713 = vld [vmem:[#allocation9 + $0x30] sm:$0xff]
          %v714 = vld [vmem:[#allocation9 + $0x38] sm:$0xff]
          %v715 = vld [vmem:[#allocation9 + $0x40] sm:$0xff]
          %v716 = vld [vmem:[#allocation9 + $0x48] sm:$0xff]
          %v717 = vld [vmem:[#allocation9 + $0x50] sm:$0xff]
          %v718 = vld [vmem:[#allocation9 + $0x58] sm:$0xff]
          %v719 = vld [vmem:[#allocation9 + $0x60] sm:$0xff]
          %v720 = vld [vmem:[#allocation9 + $0x68] sm:$0xff]
          %v721 = vld [vmem:[#allocation9 + $0x70] sm:$0xff]
          %v722 = vld [vmem:[#allocation9 + $0x78] sm:$0xff]
          %v723 = vld [vmem:[%s6] sm:$0x3]
          %v725 = vlaneseq
          %v726 = vshrl.u32 %v725, 7
          %v727 = vsub.s32 0, %v726
          %v728 = vrot.slane %v723, %v727
          %v729 = vlaneseq
          %v730 = vshrl.u32 %v729, 7
          %v731 = vsub.s32 1, %v730
          %v732 = vrot.slane %v723, %v731
          %v751 = vunpack.c.l.b16 %v707
          %v752 = vunpack.c.h.b16 %v707
          %v753 = vunpack.c.l.b16 %v708
          %v754 = vunpack.c.h.b16 %v708
          %v755 = vunpack.c.l.b16 %v709
          %v756 = vunpack.c.h.b16 %v709
          %v757 = vunpack.c.l.b16 %v710
          %v758 = vunpack.c.h.b16 %v710
          %v759 = vunpack.c.l.b16 %v711
          %v760 = vunpack.c.h.b16 %v711
          %v761 = vunpack.c.l.b16 %v712
          %v762 = vunpack.c.h.b16 %v712
          %v763 = vunpack.c.l.b16 %v713
          %v764 = vunpack.c.h.b16 %v713
          %v765 = vunpack.c.l.b16 %v714
          %v766 = vunpack.c.h.b16 %v714
          %v767 = vunpack.c.l.b16 %v715
          %v768 = vunpack.c.h.b16 %v715
          %v769 = vunpack.c.l.b16 %v716
          %v770 = vunpack.c.h.b16 %v716
          %v771 = vunpack.c.l.b16 %v717
          %v772 = vunpack.c.h.b16 %v717
          %v773 = vunpack.c.l.b16 %v718
          %v774 = vunpack.c.h.b16 %v718
          %v775 = vunpack.c.l.b16 %v719
          %v776 = vunpack.c.h.b16 %v719
          %v777 = vunpack.c.l.b16 %v720
          %v778 = vunpack.c.h.b16 %v720
          %v779 = vunpack.c.l.b16 %v721
          %v780 = vunpack.c.h.b16 %v721
          %v781 = vunpack.c.l.b16 %v722
          %v782 = vunpack.c.h.b16 %v722
          %v783 = vpack.c.b16 %v753, %v751
          %v784 = vpack.c.b16 %v754, %v752
          %v785 = vpack.c.b16 %v757, %v755
          %v786 = vpack.c.b16 %v758, %v756
          %v787 = vpack.c.b16 %v761, %v759
          %v788 = vpack.c.b16 %v762, %v760
          %v789 = vpack.c.b16 %v765, %v763
          %v790 = vpack.c.b16 %v766, %v764
          %v791 = vpack.c.b16 %v769, %v767
          %v792 = vpack.c.b16 %v770, %v768
          %v793 = vpack.c.b16 %v773, %v771
          %v794 = vpack.c.b16 %v774, %v772
          %v795 = vpack.c.b16 %v777, %v775
          %v796 = vpack.c.b16 %v778, %v776
          %v797 = vpack.c.b16 %v781, %v779
          %v798 = vpack.c.b16 %v782, %v780
          %815 = vmatprep.subr.bf16.mxu0 %v784
          %816 = vmatpush1.bf16.msra.mxu0 %v783
          %817 = vmatprep.subr.bf16.mxu0 %v786
          %818 = vmatpush1.bf16.msra.mxu0 %v785
          %819 = vmatprep.subr.bf16.mxu0 %v788
          %820 = vmatpush1.bf16.msra.mxu0 %v787
          %821 = vmatprep.subr.bf16.mxu0 %v790
          %822 = vmatpush1.bf16.msra.mxu0 %v789
          %823 = vmatprep.subr.bf16.mxu0 %v792
          %824 = vmatpush1.bf16.msra.mxu0 %v791
          %825 = vmatprep.subr.bf16.mxu0 %v794
          %826 = vmatpush1.bf16.msra.mxu0 %v793
          %827 = vmatprep.subr.bf16.mxu0 %v796
          %828 = vmatpush1.bf16.msra.mxu0 %v795
          %829 = vmatprep.subr.bf16.mxu0 %v798
          %830 = vmatpush1.bf16.msra.mxu0 %v797
          %831 = vmatprep.subr.bf16.mxu0 0
          %832 = vmatpush1.bf16.msra.mxu0 0
          %833 = vmatprep.subr.bf16.mxu0 0
          %834 = vmatpush1.bf16.msra.mxu0 0
          %835 = vmatprep.subr.bf16.mxu0 0
          %836 = vmatpush1.bf16.msra.mxu0 0
          %837 = vmatprep.subr.bf16.mxu0 0
          %838 = vmatpush1.bf16.msra.mxu0 0
          %839 = vmatprep.subr.bf16.mxu0 0
          %840 = vmatpush1.bf16.msra.mxu0 0
          %841 = vmatprep.subr.bf16.mxu0 0
          %842 = vmatpush1.bf16.msra.mxu0 0
          %843 = vmatprep.subr.bf16.mxu0 0
          %844 = vmatpush1.bf16.msra.mxu0 0
          %845 = vmatprep.subr.bf16.mxu0 0
          %846 = vmatpush1.bf16.msra.mxu0 0
          %847 = vmatprep.mubr.bf16.mxu0 0
          %848 = vmatmul.mubr.bf16.gmra.mrb[0].mxu0 %v706
          %v849 = vpop.f32.mrb[0].mxu0
          %v850 = vadd.f32 %v728, %v849
          %v851 = vpop.f32.mrb[0].mxu0
          %v852 = vadd.f32 %v732, %v851
          %v853 = vpop.f32.mrb[0].mxu0
          %v854 = vadd.f32 %v728, %v853
          %v855 = vpop.f32.mrb[0].mxu0
          %v856 = vadd.f32 %v732, %v855
          %857 = vdwg.mxu0
          %v858 = vmul.f32 %v852, 0.5
          %v859 = vmul.f32 %v856, 0.5
          %v860 = vmul.f32 %v858, 1.442695
          %v861 = vpow.pop %v860
          %v862 = vmul.f32 %v859, 1.442695
          %v863 = vpow.pop %v862
          %v864 = vld [vmem:[%s403] sm:$0xff]
          %v865 = vld [vmem:[%s403 + $0x8] sm:$0xff]
          %v866 = vmul.f32 %v861, %v864
          %v867 = vmul.f32 %v863, %v865
          %v868 = vadd.f32 %v850, %v866
          %v869 = vadd.f32 %v854, %v867
          %870 = vst [vmem:[%s445] sm:$0xff] %v868
          %871 = vst [vmem:[%s445 + $0x8] sm:$0xff] %v869
        $region80: #{tpu_custom_call.1} parent=51 // pred_fallthru
          _
        %s872 = sand.u32 %s234, 1
        %s873 = scalar_lea.sflag [#allocation5], %s872
        %s874 = sand.u32 %s234, 1
        %s875 = smul.addr %s874, 16
        %s876 = scalar_lea.vmem [#allocation12], %s875
        // Predicated region
        $region81: #{tpu_custom_call.1} parent=51 // pred_check
          %p877 = pneg %p244
        $region82: #{tpu_custom_call.1} parent=51 // pred_check_branch
          %879 = sbr.rel (%p877) target = $region84
        $region83: #{tpu_custom_call.1} parent=51 // pred_region
          %s880 = smul.u32 2, %s33
          %s882 = ssub.s32 256, 256
          %883 = vsyncadd %s873, %s882
          %s884 = smul.addr %s880, 128
          %s885 = scalar_lea.hbm %s8, %s884
          %s886 = sshll.u32 %s876, 4
          %s887 = int_to_ptr.vmem [resolvable:$true] %s886
          %892 = dma.vmem_to_hbm [thread:$0]  %s887, 256, %s885, %s873, 128, 128, 8
        $region84: #{tpu_custom_call.1} parent=51 // pred_fallthru
          _
      $region52: #{tpu_custom_call.1} parent=5 // pred_fallthru
        _
      %p893 = scmp.le.s32.totalorder 2, %s24
      // Predicated region
      $region85: #{tpu_custom_call.1} parent=5 // pred_check
        %p894 = pneg %p893
      $region86: #{tpu_custom_call.1} parent=5 // pred_check_branch
        %896 = sbr.rel (%p894) target = $region88
      $region87: #{tpu_custom_call.1} parent=5 // pred_region
        %s897 = ssub.s32 %s24, 2
        // Predicated region
        $region89: #{tpu_custom_call.1} parent=87 // pred_check
          %p898 = pneg %p250
        $region90: #{tpu_custom_call.1} parent=87 // pred_check_branch
          %900 = sbr.rel (%p898) target = $region92
        $region91: #{tpu_custom_call.1} parent=87 // pred_region
          %s901 = sand.u32 %s235, 1
          %s902 = scalar_lea.sflag [#allocation5], %s901
          %s903 = sand.u32 %s235, 1
          %s904 = smul.addr %s903, 16
          %s905 = scalar_lea.vmem [#allocation12], %s904
          %906 = dma.done %s902, 256
        $region92: #{tpu_custom_call.1} parent=87 // pred_fallthru
          _
      $region88: #{tpu_custom_call.1} parent=5 // pred_fallthru
        _
    $region6: #{tpu_custom_call.1} parent=1 // loop_footer
      %s28 = sadd.s32 1, %s24
    $region7: #{tpu_custom_call.1} parent=1 // loop_footer_branch
      %23 = sbr.rel target = $region3
    $region8: #{tpu_custom_call.1} parent=1 // loop_exit
      _
    %907 = vsyncpa [#allocation4], 1
    %s908 = scalar_lea.sflag [#allocation4], 1
    %909 = vsyncpa %s908, 1
    %910 = vsyncpa [#allocation7], 1
    %s911 = scalar_lea.sflag [#allocation7], 1
    %912 = vsyncpa %s911, 1
    %913 = vsyncpa [#allocation10], 1
    %914 = vsyncpa [#allocation5], 1
    %s915 = scalar_lea.sflag [#allocation5], 1
    %916 = vsyncpa %s915, 1

</llo_original>
